<compile_context>
chip_gen: v6e
topology: v6e:2x2x1
jax: 0.10.0
libtpu: 0.0.40
codegen_flags: <defaults>
</compile_context>

<pallas_src>
import math

import jax
import jax.numpy as jnp
from jax.experimental import pallas as pl
from jax.experimental.pallas import tpu as pltpu


def bimap_group_kernel(w_ref, wt_bd_ref, xw_ref, o_ref):
    # (out, in) @ (in, G*in) -> (out, G*in): W @ x_b for all G samples at once.
    wx = jnp.dot(w_ref[...], xw_ref[...], preferred_element_type=jnp.float32)
    # (out, G*in) @ (G*in, G*out) -> (out, G*out): block-diagonal W^T applies the
    # per-sample right multiplication with no in-kernel transpose or narrow store.
    o_ref[...] = jnp.dot(
        wx, wt_bd_ref[...], preferred_element_type=jnp.float32
    ).astype(o_ref.dtype)


def _lcm(a, b):
    return a * b // math.gcd(a, b)


def bimap_forward(w, x):
    """W @ x @ W.T for a single SPD matrix (in,in) or a batch (B,in,in)."""
    out_size, in_size = w.shape
    single = x.ndim == 2
    if single:
        x = x[None]
    batch = x.shape[0]
    assert x.shape == (batch, in_size, in_size)

    # Choose group so both the x block (group*in) and the out block (group*out)
    # are lane-dense (multiples of 128).
    group = _lcm(128 // math.gcd(128, out_size), 128 // math.gcd(128, in_size))
    padded_b = ((batch + group - 1) // group) * group
    if padded_b != batch:
        x = jnp.concatenate(
            [x, jnp.zeros((padded_b - batch, in_size, in_size), x.dtype)], axis=0
        )
    num_groups = padded_b // group

    # Wrapper-side layout plumbing (cheap XLA ops, outside the kernel):
    #   x_wide[i, b*in + j] = x[b, i, j]
    x_wide = jnp.transpose(x, (1, 0, 2)).reshape(in_size, padded_b * in_size)
    #   block-diagonal W^T: wt_bd[g*in + j, g*out + p] = W[p, j]
    wt_bd = jnp.kron(jnp.eye(group, dtype=w.dtype), w.T)

    flops = (
        2 * out_size * in_size * (padded_b * in_size)  # W @ x_wide blocks
        + 2 * num_groups * out_size * (group * in_size) * (group * out_size)
    )
    bytes_accessed = 4 * (
        w.size + wt_bd.size + x_wide.size + out_size * padded_b * out_size
    )

    out_wide = pl.pallas_call(
        bimap_group_kernel,
        out_shape=jax.ShapeDtypeStruct((out_size, padded_b * out_size), jnp.float32),
        grid=(num_groups,),
        in_specs=[
            # Resident weights: same block every grid step -> DMA'd once.
            pl.BlockSpec((out_size, in_size), lambda g: (0, 0)),
            pl.BlockSpec((group * in_size, group * out_size), lambda g: (0, 0)),
            # Pipelined lane-dense x slab for this group of samples.
            pl.BlockSpec((in_size, group * in_size), lambda g: (0, g)),
        ],
        out_specs=pl.BlockSpec((out_size, group * out_size), lambda g: (0, g)),
        compiler_params=pltpu.CompilerParams(dimension_semantics=("parallel",)),
        cost_estimate=pl.CostEstimate(
            flops=flops, transcendentals=0, bytes_accessed=bytes_accessed
        ),
    )(w, wt_bd, x_wide)

    # Unpack the wide slab back to (B, out, out).
    out = out_wide.reshape(out_size, padded_b, out_size).transpose(1, 0, 2)[:batch]
    return out[0] if single else out


def init_bimap_weights(key, in_size, out_size):
    # Mirrors BiMapLayer.__init__: QR of randn(in,in)*sqrt(2/out), keep first
    # `out_size` rows. Deterministic via PRNGKey.
    a = jax.random.normal(key, (in_size, in_size), dtype=jnp.float32)
    a = a * jnp.sqrt(jnp.float32(2.0 / out_size))
    q, _ = jnp.linalg.qr(a)
    return q[:out_size, :]


if __name__ == "__main__":
    in_size, out_size, batch = 32, 16, 16

    key = jax.random.PRNGKey(0)
    k_w, k_x = jax.random.split(key)

    W = init_bimap_weights(k_w, in_size, out_size)

    # Batch of small SPD inputs: x_b = A_b @ A_b.T + I (typical SPDNet input).
    A = jax.random.normal(k_x, (batch, in_size, in_size), dtype=jnp.float32)
    x = jnp.einsum("bij,bkj->bik", A, A) + jnp.eye(in_size, dtype=jnp.float32)

    out = bimap_forward(W, x)
    out = jax.block_until_ready(out)

    # Correctness check against a high-precision JAX reference.
    ref = jnp.einsum(
        "oi,bij,pj->bop", W, x, W, precision=jax.lax.Precision.HIGHEST
    )
    assert out.shape == (batch, out_size, out_size)
    assert jnp.allclose(out, ref, atol=1e-3, rtol=1e-3), float(
        jnp.max(jnp.abs(out - ref))
    )

    # Single-matrix path matches the original PyTorch module signature.
    out1 = bimap_forward(W, x[0])
    assert out1.shape == (out_size, out_size)
    assert jnp.allclose(out1, ref[0], atol=1e-3, rtol=1e-3)

    print("KERNEL_OK")
</pallas_src>

<mosaic_0001>
module attributes {stable_mosaic.version = 11 : i64} {
  func.func @bimap_group_kernel(%arg0: i32, %arg1: memref<16x32xf32, #tpu.memory_space<vmem>>, %arg2: memref<256x128xf32, #tpu.memory_space<vmem>>, %arg3: memref<32x256xf32, #tpu.memory_space<vmem>>, %arg4: memref<16x128xf32, #tpu.memory_space<vmem>>) attributes {dimension_semantics = [#tpu.dimension_semantics<parallel>], iteration_bounds = array<i64: 2>, scalar_prefetch = 0 : i64, scratch_operands = 0 : i64, tpu.core_type = #tpu.core_type<tc>, window_params = [{pipeline_mode = #tpu.pipeline_mode<synchronous>, transform_indices = @transform_0, window_bounds = array<i64: 16, 32>}, {pipeline_mode = #tpu.pipeline_mode<synchronous>, transform_indices = @transform_1, window_bounds = array<i64: 256, 128>}, {transform_indices = @transform_2, window_bounds = array<i64: 32, 256>}, {transform_indices = @transform_3, window_bounds = array<i64: 16, 128>}]} {
    %c0 = arith.constant 0 : index
    %c0_0 = arith.constant 0 : index
    %0 = vector.load %arg1[%c0, %c0_0] : memref<16x32xf32, #tpu.memory_space<vmem>>, vector<16x32xf32>
    %c0_1 = arith.constant 0 : index
    %c0_2 = arith.constant 0 : index
    %1 = vector.load %arg3[%c0_1, %c0_2] : memref<32x256xf32, #tpu.memory_space<vmem>>, vector<32x256xf32>
    %cst = arith.constant dense<0.000000e+00> : vector<16x256xf32>
    %2 = tpu.matmul %0, %1, %cst {dimension_numbers = #tpu.dot_dimension_numbers<[1], [0], [0], [1], [0, 0, 1, 1], [], []>} : vector<16x32xf32>, vector<32x256xf32>, vector<16x256xf32> -> vector<16x256xf32>
    %c0_3 = arith.constant 0 : index
    %c0_4 = arith.constant 0 : index
    %3 = vector.load %arg2[%c0_3, %c0_4] : memref<256x128xf32, #tpu.memory_space<vmem>>, vector<256x128xf32>
    %cst_5 = arith.constant dense<0.000000e+00> : vector<16x128xf32>
    %4 = tpu.matmul %2, %3, %cst_5 {dimension_numbers = #tpu.dot_dimension_numbers<[1], [0], [0], [1], [0, 0, 1, 1], [], []>} : vector<16x256xf32>, vector<256x128xf32>, vector<16x128xf32> -> vector<16x128xf32>
    %c0_6 = arith.constant 0 : index
    %c0_7 = arith.constant 0 : index
    %5 = vector.load %arg4[%c0_6, %c0_7] : memref<16x128xf32, #tpu.memory_space<vmem>>, vector<16x128xf32>
    tpu.vector_store %arg4[%c0_6, %c0_7], %4 {strides = array<i32>} : memref<16x128xf32, #tpu.memory_space<vmem>>, vector<16x128xf32>,
    return
  }
  func.func @transform_0(%arg0: i32) -> (i32, i32) {
    %c0_i32 = arith.constant 0 : i32
    %c0_i32_0 = arith.constant 0 : i32
    %c0_i32_1 = arith.constant 0 : i32
    return %c0_i32, %c0_i32_0 : i32, i32
  }
  func.func @transform_1(%arg0: i32) -> (i32, i32) {
    %c0_i32 = arith.constant 0 : i32
    %c0_i32_0 = arith.constant 0 : i32
    %c0_i32_1 = arith.constant 0 : i32
    return %c0_i32, %c0_i32_0 : i32, i32
  }
  func.func @transform_2(%arg0: i32) -> (i32, i32) {
    %c0_i32 = arith.constant 0 : i32
    %c0_i32_0 = arith.constant 0 : i32
    return %c0_i32, %arg0 : i32, i32
  }
  func.func @transform_3(%arg0: i32) -> (i32, i32) {
    %c0_i32 = arith.constant 0 : i32
    %c0_i32_0 = arith.constant 0 : i32
    return %c0_i32, %arg0 : i32, i32
  }
}

</mosaic_0001>

<llo_original>
// kernel: tpu_custom_call.1
$region0: #{tpu_custom_call.1}
  #allocation0 [shape = 'u32[]', space=smem, size = 0x4, offset = 0x4, fixed_abs, tag = 'smem constant byte address 0x4 - core index']
  #allocation1 [shape = 'u32[144,128]{1,0:T(1,128)}', space=vmem, size = 0x12000, scoped, tag = 'internal scratch']
  %s0 = inlined_call_operand.hbm [shape: f32[16,32], index: 0, kind: input, shape index: {}]
  %s1 = inlined_call_operand.hbm [shape: f32[256,128], index: 1, kind: input, shape index: {}]
  %s2 = inlined_call_operand.hbm [shape: f32[32,512], index: 2, kind: input, shape index: {}]
  %s3 = inlined_call_operand.hbm [shape: f32[16,256], index: 3, kind: output, shape index: {}]
  %s4 = sld [smem:[#allocation0]]
  $region57: #{tpu_custom_call.1} parent=0
    _
  %s6 = ssub.s32 1, %s4
  %s7 = scalar_select 0, %s6, %s4
  $region1: #{tpu_custom_call.1} parent=0
    #allocation2 [shape = 'u8[8192]{0}', space=vmem, size = 0x2000, scoped, tag = 'input window, operand 0, single buffered']
    #allocation3 [shape = 's32[2]{0}', space=sflag, size = 0x8, scoped, tag = 'scoped memory for tpu_custom_call.1']
    #allocation4 [shape = 's32[2]{0}', space=sflag, size = 0x8, scoped, tag = 'scoped memory for tpu_custom_call.1']
    #allocation5 [shape = 'u8[131072]{0}', space=vmem, size = 0x20000, scoped, tag = 'input window, operand 1, single buffered']
    #allocation6 [shape = 's32[1]{0}', space=sflag, size = 0x4, scoped, tag = 'scoped memory for tpu_custom_call.1']
    #allocation7 [shape = 'u8[65536]{0}', space=vmem, size = 0x10000, scoped, tag = 'input window, operand 2']
    #allocation8 [shape = 'u8[16384]{0}', space=vmem, size = 0x4000, scoped, tag = 'output window, operand 0']
    %8 = vsyncpa [#allocation3], 0
    %9 = vsyncpa [#allocation6], 0
    %10 = vsyncpa [#allocation4], 0
    %s11 = scalar_lea.sflag [#allocation4], 1
    %12 = vsyncpa %s11, 0
    loop: start=0, step=1, limit=4
    $region2: #{tpu_custom_call.1} parent=1 // loop_pre_header
      _
    $region3: #{tpu_custom_call.1} parent=1 // loop_header
      %s14 = sphi 0, %s18
      %p15 = scmp.ge.s32.totalorder %s14, 4
      %s22 = sphi 0, %s22
      %s24 = sphi 0, %s22
      %s25 = sphi 0, %s24
      %s39 = sphi 0, %s25
      %s43 = sphi 0, %s43
      %s45 = sphi 0, %s43
      %s46 = sphi 0, %s45
      %s60 = sphi 0, %s46
      %s66 = sphi 0, %s68
      %s69 = sphi 0, %s66
      %s70 = sphi 0, %s69
      %s86 = sphi 0, %s70
      %s92 = sphi 0, %s94
      %s95 = sphi 0, %s92
      %s96 = sphi 0, %s95
      %s112 = sphi 0, %s96
    $region4: #{tpu_custom_call.1} parent=1 // loop_header_branch
      %17 = sbr.rel (%p15) target = $region8
    $region5: #{tpu_custom_call.1} parent=1 // loop_body
      %s19 = ssub.s32 %s14, 1
      %s20 = ssub.s32 %s14, 2
      %s21 = sadd.s32 %s14, 1
      %s23 = sadd.s32 %s22, 1
      %p26 = scmp.eq.s32.totalorder %s14, 1
      %p27 = scmp.ne.s32.totalorder %s22, %s24
      %p28 = scmp.eq.s32.totalorder %s14, 0
      %p29 = por %p27, %p28
      %p30 = scmp.ne.s32.totalorder %s22, %s24
      %p31 = scmp.eq.s32.totalorder %s19, 1
      %p32 = por %p30, %p31
      %p33 = scmp.ne.s32.totalorder %s24, %s25
      %p34 = scmp.eq.s32.totalorder %s19, 0
      %p35 = por %p33, %p34
      %p36 = scmp.ne.s32.totalorder %s24, %s25
      %p37 = scmp.eq.s32.totalorder %s20, 1
      %p38 = por %p36, %p37
      %p40 = scmp.ne.s32.totalorder %s25, %s39
      %p41 = scmp.eq.s32.totalorder %s20, 0
      %p42 = por %p40, %p41
      %s44 = sadd.s32 %s43, 1
      %p47 = scmp.eq.s32.totalorder %s14, 1
      %p48 = scmp.ne.s32.totalorder %s43, %s45
      %p49 = scmp.eq.s32.totalorder %s14, 0
      %p50 = por %p48, %p49
      %p51 = scmp.ne.s32.totalorder %s43, %s45
      %p52 = scmp.eq.s32.totalorder %s19, 1
      %p53 = por %p51, %p52
      %p54 = scmp.ne.s32.totalorder %s45, %s46
      %p55 = scmp.eq.s32.totalorder %s19, 0
      %p56 = por %p54, %p55
      %p57 = scmp.ne.s32.totalorder %s45, %s46
      %p58 = scmp.eq.s32.totalorder %s20, 1
      %p59 = por %p57, %p58
      %p61 = scmp.ne.s32.totalorder %s46, %s60
      %p62 = scmp.eq.s32.totalorder %s20, 0
      %p63 = por %p61, %p62
      %s64 = ssub.s32 %s14, %s21
      %p65 = scmp.eq.s32.totalorder %s64, 0
      %s67 = sadd.s32 %s66, 1
      %s68 = scalar_select %p65, %s66, %s67
      %p71 = pneg %p65
      %p72 = scmp.eq.s32.totalorder %s14, 1
      %p73 = por %p71, %p72
      %p74 = scmp.ne.s32.totalorder %s66, %s69
      %p75 = scmp.eq.s32.totalorder %s14, 0
      %p76 = por %p74, %p75
      %p77 = scmp.ne.s32.totalorder %s66, %s69
      %p78 = scmp.eq.s32.totalorder %s19, 1
      %p79 = por %p77, %p78
      %p80 = scmp.ne.s32.totalorder %s69, %s70
      %p81 = scmp.eq.s32.totalorder %s19, 0
      %p82 = por %p80, %p81
      %p83 = scmp.ne.s32.totalorder %s69, %s70
      %p84 = scmp.eq.s32.totalorder %s20, 1
      %p85 = por %p83, %p84
      %p87 = scmp.ne.s32.totalorder %s70, %s86
      %p88 = scmp.eq.s32.totalorder %s20, 0
      %p89 = por %p87, %p88
      %s90 = ssub.s32 %s14, %s21
      %p91 = scmp.eq.s32.totalorder %s90, 0
      %s93 = sadd.s32 %s92, 1
      %s94 = scalar_select %p91, %s92, %s93
      %p97 = pneg %p91
      %p98 = scmp.eq.s32.totalorder %s14, 1
      %p99 = por %p97, %p98
      %p100 = scmp.ne.s32.totalorder %s92, %s95
      %p101 = scmp.eq.s32.totalorder %s14, 0
      %p102 = por %p100, %p101
      %p103 = scmp.ne.s32.totalorder %s92, %s95
      %p104 = scmp.eq.s32.totalorder %s19, 1
      %p105 = por %p103, %p104
      %p106 = scmp.ne.s32.totalorder %s95, %s96
      %p107 = scmp.eq.s32.totalorder %s19, 0
      %p108 = por %p106, %p107
      %p109 = scmp.ne.s32.totalorder %s95, %s96
      %p110 = scmp.eq.s32.totalorder %s20, 1
      %p111 = por %p109, %p110
      %p113 = scmp.ne.s32.totalorder %s96, %s112
      %p114 = scmp.eq.s32.totalorder %s20, 0
      %p115 = por %p113, %p114
      %p116 = scmp.le.s32.totalorder 1, %s14
      %p117 = scmp.lt.s32.totalorder %s14, 3
      %p118 = pnand %p116, %p117
      %p119 = pneg %p118
      // Predicated region
      $region9: #{tpu_custom_call.1} parent=5 // pred_check
        _
      $region10: #{tpu_custom_call.1} parent=5 // pred_check_branch
        %121 = sbr.rel (%p118) target = $region12
      $region11: #{tpu_custom_call.1} parent=5 // pred_region
        %s122 = ssub.s32 %s14, 1
        // Predicated region
        $region13: #{tpu_custom_call.1} parent=11 // pred_check
          %p123 = pneg %p35
        $region14: #{tpu_custom_call.1} parent=11 // pred_check_branch
          %125 = sbr.rel (%p123) target = $region16
        $region15: #{tpu_custom_call.1} parent=11 // pred_region
          %s127 = ssub.s32 256, 256
          %128 = vsyncadd [#allocation3], %s127
          %s129 = sshll.u32 [#allocation2], 4
          %s130 = int_to_ptr.vmem [resolvable:$true] %s129
          %135 = dma.hbm_to_vmem [thread:$0]  %s0, 256, %s130, [#allocation3], 128, 128, 8
        $region16: #{tpu_custom_call.1} parent=11 // pred_fallthru
          _
        // Predicated region
        $region17: #{tpu_custom_call.1} parent=11 // pred_check
          %p136 = pneg %p56
        $region18: #{tpu_custom_call.1} parent=11 // pred_check_branch
          %138 = sbr.rel (%p136) target = $region20
        $region19: #{tpu_custom_call.1} parent=11 // pred_region
          %s140 = ssub.s32 4096, 4096
          %141 = vsyncadd [#allocation6], %s140
          %s142 = sshll.u32 [#allocation5], 4
          %s143 = int_to_ptr.vmem [resolvable:$true] %s142
          %148 = dma.hbm_to_vmem [thread:$0]  %s1, 4096, %s143, [#allocation6], 128, 128, 8
        $region20: #{tpu_custom_call.1} parent=11 // pred_fallthru
          _
      $region12: #{tpu_custom_call.1} parent=5 // pred_fallthru
        _
      %p149 = scmp.lt.s32.totalorder %s14, 2
      // Predicated region
      $region21: #{tpu_custom_call.1} parent=5 // pred_check
        %p150 = pneg %p149
      $region22: #{tpu_custom_call.1} parent=5 // pred_check_branch
        %152 = sbr.rel (%p150) target = $region24
      $region23: #{tpu_custom_call.1} parent=5 // pred_region
        // Predicated region
        $region25: #{tpu_custom_call.1} parent=23 // pred_check
          %p153 = pneg %p76
        $region26: #{tpu_custom_call.1} parent=23 // pred_check_branch
          %155 = sbr.rel (%p153) target = $region28
        $region27: #{tpu_custom_call.1} parent=23 // pred_region
          %s156 = sand.u32 %s14, 1
          %s157 = scalar_lea.sflag [#allocation3], %s156
          %s158 = sand.u32 %s66, 1
          %s159 = smul.addr %s158, 64
          %s160 = scalar_lea.vmem [#allocation7], %s159
          %s161 = smul.u32 2, %s14
          %s163 = ssub.s32 1024, 1024
          %164 = vsyncadd %s157, %s163
          %s165 = smul.addr %s161, 128
          %s166 = scalar_lea.hbm %s2, %s165
          %s167 = sshll.u32 %s160, 4
          %s168 = int_to_ptr.vmem [resolvable:$true] %s167
          %173 = dma.hbm_to_vmem [thread:$0]  %s166, 1024, %s168, %s157, 512, 256, 16
        $region28: #{tpu_custom_call.1} parent=23 // pred_fallthru
          _
      $region24: #{tpu_custom_call.1} parent=5 // pred_fallthru
        _
      %p174 = scmp.le.s32.totalorder 1, %s14
      %p175 = scmp.lt.s32.totalorder %s14, 3
      %p176 = pnand %p174, %p175
      %p177 = pneg %p176
      // Predicated region
      $region29: #{tpu_custom_call.1} parent=5 // pred_check
        _
      $region30: #{tpu_custom_call.1} parent=5 // pred_check_branch
        %179 = sbr.rel (%p176) target = $region32
      $region31: #{tpu_custom_call.1} parent=5 // pred_region
        %s180 = ssub.s32 %s14, 1
        // Predicated region
        $region33: #{tpu_custom_call.1} parent=31 // pred_check
          %p181 = pneg %p35
        $region34: #{tpu_custom_call.1} parent=31 // pred_check_branch
          %183 = sbr.rel (%p181) target = $region36
        $region35: #{tpu_custom_call.1} parent=31 // pred_region
          %184 = dma.done [#allocation3], 256
        $region36: #{tpu_custom_call.1} parent=31 // pred_fallthru
          _
        // Predicated region
        $region37: #{tpu_custom_call.1} parent=31 // pred_check
          %p185 = pneg %p56
        $region38: #{tpu_custom_call.1} parent=31 // pred_check_branch
          %187 = sbr.rel (%p185) target = $region40
        $region39: #{tpu_custom_call.1} parent=31 // pred_region
          %188 = dma.done [#allocation6], 4096
        $region40: #{tpu_custom_call.1} parent=31 // pred_fallthru
          _
        %s189 = sand.u32 %s19, 1
        %s190 = scalar_lea.sflag [#allocation3], %s189
        %s191 = sand.u32 %s69, 1
        %s192 = smul.addr %s191, 64
        %s193 = scalar_lea.vmem [#allocation7], %s192
        // Predicated region
        $region41: #{tpu_custom_call.1} parent=31 // pred_check
          %p194 = pneg %p82
        $region42: #{tpu_custom_call.1} parent=31 // pred_check_branch
          %196 = sbr.rel (%p194) target = $region44
        $region43: #{tpu_custom_call.1} parent=31 // pred_region
          %197 = dma.done %s190, 1024
        $region44: #{tpu_custom_call.1} parent=31 // pred_fallthru
          _
        %p198 = pneg %p35
        %p199 = pneg %p32
        %p200 = pneg %p56
        %p201 = pneg %p53
        %s202 = sand.u32 %s19, 1
        %s203 = scalar_lea.sflag [#allocation3], %s202
        %s204 = sand.u32 %s69, 1
        %s205 = smul.addr %s204, 64
        %s206 = scalar_lea.vmem [#allocation7], %s205
        %p207 = pneg %p82
        %p208 = pneg %p79
        %p209 = pneg %p108
        %p210 = pneg %p105
        %s211 = sand.u32 %s95, 1
        %s212 = scalar_lea.sflag [#allocation4], %s211
        %s213 = sand.u32 %s95, 1
        %s214 = smul.addr %s213, 16
        %s215 = scalar_lea.vmem [#allocation8], %s214
        %s216 = smul.u32 2, %s19
        %v217 = vld [vmem:[#allocation2] sm:$0xff]
        %v218 = vld [vmem:[#allocation2 + $0x8] sm:$0xff]
        %v219 = vld [vmem:[%s193] sm:$0xff]
        %v220 = vld [vmem:[%s193 + $0x8] sm:$0xff]
        %v221 = vld [vmem:[%s193 + $0x10] sm:$0xff]
        %v222 = vld [vmem:[%s193 + $0x18] sm:$0xff]
        %v223 = vld [vmem:[%s193 + $0x20] sm:$0xff]
        %v224 = vld [vmem:[%s193 + $0x28] sm:$0xff]
        %v225 = vld [vmem:[%s193 + $0x30] sm:$0xff]
        %v226 = vld [vmem:[%s193 + $0x38] sm:$0xff]
        %vm227 = vcmask 261120
        %v229 = vsel %vm227, %v217, 0
        %v232 = vsel %vm227, %v218, 0
        %234 = vmatprep.subr.mxu0 0.0
        %235 = vmatpush1.msra.mxu0 0.0
        %236 = vmatprep.subr.mxu0 0.0
        %237 = vmatpush1.msra.mxu0 0.0
        %238 = vmatprep.subr.mxu0 0.0
        %239 = vmatpush1.msra.mxu0 0.0
        %240 = vmatprep.subr.mxu0 0.0
        %241 = vmatpush1.msra.mxu0 0.0
        %242 = vmatprep.subr.mxu0 0.0
        %243 = vmatpush1.msra.mxu0 0.0
        %244 = vmatprep.subr.mxu0 0.0
        %245 = vmatpush1.msra.mxu0 0.0
        %246 = vmatprep.subr.mxu0 0.0
        %247 = vmatpush1.msra.mxu0 0.0
        %248 = vmatprep.subr.mxu0 0.0
        %249 = vmatpush1.msra.mxu0 0.0
        %250 = vmatprep.subr.mxu0 0.0
        %251 = vmatpush1.msra.mxu0 0.0
        %252 = vmatprep.subr.mxu0 0.0
        %253 = vmatpush1.msra.mxu0 0.0
        %254 = vmatprep.subr.mxu0 0.0
        %255 = vmatpush1.msra.mxu0 0.0
        %256 = vmatprep.subr.mxu0 0.0
        %257 = vmatpush1.msra.mxu0 0.0
        %258 = vmatprep.subr.mxu0 %v226
        %259 = vmatpush1.msra.mxu0 %v225
        %260 = vmatprep.subr.mxu0 %v224
        %261 = vmatpush1.msra.mxu0 %v223
        %262 = vmatprep.subr.mxu0 %v222
        %263 = vmatpush1.msra.mxu0 %v221
        %264 = vmatprep.subr.mxu0 %v220
        %265 = vmatpush1.msra.mxu0 %v219
        %266 = vmatprep.subr.mxu0 0.0
        %267 = vmatpush2.msra.mxu0 0.0
        %268 = vmatprep.subr.mxu0 0.0
        %269 = vmatpush2.msra.mxu0 0.0
        %270 = vmatprep.subr.mxu0 0.0
        %271 = vmatpush2.msra.mxu0 0.0
        %272 = vmatprep.subr.mxu0 0.0
        %273 = vmatpush2.msra.mxu0 0.0
        %274 = vmatprep.subr.mxu0 0.0
        %275 = vmatpush2.msra.mxu0 0.0
        %276 = vmatprep.subr.mxu0 0.0
        %277 = vmatpush2.msra.mxu0 0.0
        %278 = vmatprep.subr.mxu0 0.0
        %279 = vmatpush2.msra.mxu0 0.0
        %280 = vmatprep.subr.mxu0 0.0
        %281 = vmatpush2.msra.mxu0 0.0
        %282 = vmatprep.subr.mxu0 0.0
        %283 = vmatpush2.msra.mxu0 0.0
        %284 = vmatprep.subr.mxu0 0.0
        %285 = vmatpush2.msra.mxu0 0.0
        %286 = vmatprep.subr.mxu0 0.0
        %287 = vmatpush2.msra.mxu0 0.0
        %288 = vmatprep.subr.mxu0 0.0
        %289 = vmatpush2.msra.mxu0 0.0
        %290 = vmatprep.subr.mxu0 0.0
        %291 = vmatpush2.msra.mxu0 0.0
        %292 = vmatprep.subr.mxu0 0.0
        %293 = vmatpush2.msra.mxu0 0.0
        %294 = vmatprep.subr.mxu0 0.0
        %295 = vmatpush2.msra.mxu0 0.0
        %296 = vmatprep.subr.mxu0 0.0
        %297 = vmatpush2.msra.mxu0 0.0
        %298 = vmatprep.mubr.f32.mxu0 0.0
        %299 = vmatmul.mubr.f32.gmra.mxu0 %v229
        %v300 = vpop.f32.mrf.mxu0
        %v301 = vadd.f32 0.0, %v300
        %v302 = vpop.f32.mrf.mxu0
        %v303 = vadd.f32 0.0, %v302
        %304 = vmatprep.mubr.f32.mxu0 0.0
        %305 = vmatmul.mubr.f32.gmra.mxu0 %v232
        %v306 = vpop.f32.mrf.mxu0
        %v307 = vadd.f32 0.0, %v306
        %v308 = vpop.f32.mrf.mxu0
        %v309 = vadd.f32 0.0, %v308
        %310 = vdwg.mxu0
        %v311 = vld [vmem:[#allocation5] sm:$0xff]
        %v312 = vld [vmem:[#allocation5 + $0x8] sm:$0xff]
        %v313 = vld [vmem:[#allocation5 + $0x10] sm:$0xff]
        %v314 = vld [vmem:[#allocation5 + $0x18] sm:$0xff]
        %v315 = vld [vmem:[#allocation5 + $0x20] sm:$0xff]
        %v316 = vld [vmem:[#allocation5 + $0x28] sm:$0xff]
        %v317 = vld [vmem:[#allocation5 + $0x30] sm:$0xff]
        %v318 = vld [vmem:[#allocation5 + $0x38] sm:$0xff]
        %v319 = vld [vmem:[#allocation5 + $0x40] sm:$0xff]
        %v320 = vld [vmem:[#allocation5 + $0x48] sm:$0xff]
        %v321 = vld [vmem:[#allocation5 + $0x50] sm:$0xff]
        %v322 = vld [vmem:[#allocation5 + $0x58] sm:$0xff]
        %v323 = vld [vmem:[#allocation5 + $0x60] sm:$0xff]
        %v324 = vld [vmem:[#allocation5 + $0x68] sm:$0xff]
        %v325 = vld [vmem:[#allocation5 + $0x70] sm:$0xff]
        %v326 = vld [vmem:[#allocation5 + $0x78] sm:$0xff]
        %v327 = vld [vmem:[#allocation5 + $0x80] sm:$0xff]
        %v328 = vld [vmem:[#allocation5 + $0x88] sm:$0xff]
        %v329 = vld [vmem:[#allocation5 + $0x90] sm:$0xff]
        %v330 = vld [vmem:[#allocation5 + $0x98] sm:$0xff]
        %v331 = vld [vmem:[#allocation5 + $0xa0] sm:$0xff]
        %v332 = vld [vmem:[#allocation5 + $0xa8] sm:$0xff]
        %v333 = vld [vmem:[#allocation5 + $0xb0] sm:$0xff]
        %v334 = vld [vmem:[#allocation5 + $0xb8] sm:$0xff]
        %v335 = vld [vmem:[#allocation5 + $0xc0] sm:$0xff]
        %v336 = vld [vmem:[#allocation5 + $0xc8] sm:$0xff]
        %v337 = vld [vmem:[#allocation5 + $0xd0] sm:$0xff]
        %v338 = vld [vmem:[#allocation5 + $0xd8] sm:$0xff]
        %v339 = vld [vmem:[#allocation5 + $0xe0] sm:$0xff]
        %v340 = vld [vmem:[#allocation5 + $0xe8] sm:$0xff]
        %v341 = vld [vmem:[#allocation5 + $0xf0] sm:$0xff]
        %v342 = vld [vmem:[#allocation5 + $0xf8] sm:$0xff]
        %343 = vmatprep.subr.mxu0 0.0
        %344 = vmatpush1.msra.mxu0 %v326
        %345 = vmatprep.subr.mxu0 0.0
        %346 = vmatpush1.msra.mxu0 %v325
        %347 = vmatprep.subr.mxu0 0.0
        %348 = vmatpush1.msra.mxu0 %v324
        %349 = vmatprep.subr.mxu0 0.0
        %350 = vmatpush1.msra.mxu0 %v323
        %351 = vmatprep.subr.mxu0 0.0
        %352 = vmatpush1.msra.mxu0 %v322
        %353 = vmatprep.subr.mxu0 0.0
        %354 = vmatpush1.msra.mxu0 %v321
        %355 = vmatprep.subr.mxu0 0.0
        %356 = vmatpush1.msra.mxu0 %v320
        %357 = vmatprep.subr.mxu0 0.0
        %358 = vmatpush1.msra.mxu0 %v319
        %359 = vmatprep.subr.mxu0 0.0
        %360 = vmatpush1.msra.mxu0 %v318
        %361 = vmatprep.subr.mxu0 0.0
        %362 = vmatpush1.msra.mxu0 %v317
        %363 = vmatprep.subr.mxu0 0.0
        %364 = vmatpush1.msra.mxu0 %v316
        %365 = vmatprep.subr.mxu0 0.0
        %366 = vmatpush1.msra.mxu0 %v315
        %367 = vmatprep.subr.mxu0 0.0
        %368 = vmatpush1.msra.mxu0 %v314
        %369 = vmatprep.subr.mxu0 0.0
        %370 = vmatpush1.msra.mxu0 %v313
        %371 = vmatprep.subr.mxu0 0.0
        %372 = vmatpush1.msra.mxu0 %v312
        %373 = vmatprep.subr.mxu0 0.0
        %374 = vmatpush1.msra.mxu0 %v311
        %375 = vmatprep.subr.mxu0 0.0
        %376 = vmatpush2.msra.mxu0 %v342
        %377 = vmatprep.subr.mxu0 0.0
        %378 = vmatpush2.msra.mxu0 %v341
        %379 = vmatprep.subr.mxu0 0.0
        %380 = vmatpush2.msra.mxu0 %v340
        %381 = vmatprep.subr.mxu0 0.0
        %382 = vmatpush2.msra.mxu0 %v339
        %383 = vmatprep.subr.mxu0 0.0
        %384 = vmatpush2.msra.mxu0 %v338
        %385 = vmatprep.subr.mxu0 0.0
        %386 = vmatpush2.msra.mxu0 %v337
        %387 = vmatprep.subr.mxu0 0.0
        %388 = vmatpush2.msra.mxu0 %v336
        %389 = vmatprep.subr.mxu0 0.0
        %390 = vmatpush2.msra.mxu0 %v335
        %391 = vmatprep.subr.mxu0 0.0
        %392 = vmatpush2.msra.mxu0 %v334
        %393 = vmatprep.subr.mxu0 0.0
        %394 = vmatpush2.msra.mxu0 %v333
        %395 = vmatprep.subr.mxu0 0.0
        %396 = vmatpush2.msra.mxu0 %v332
        %397 = vmatprep.subr.mxu0 0.0
        %398 = vmatpush2.msra.mxu0 %v331
        %399 = vmatprep.subr.mxu0 0.0
        %400 = vmatpush2.msra.mxu0 %v330
        %401 = vmatprep.subr.mxu0 0.0
        %402 = vmatpush2.msra.mxu0 %v329
        %403 = vmatprep.subr.mxu0 0.0
        %404 = vmatpush2.msra.mxu0 %v328
        %405 = vmatprep.subr.mxu0 0.0
        %406 = vmatpush2.msra.mxu0 %v327
        %407 = vmatprep.mubr.f32.mxu0 %v303
        %408 = vmatmul.mubr.f32.gmra.mxu0 %v301
        %v409 = vpop.f32.mrf.mxu0
        %v410 = vadd.f32 0.0, %v409
        %v411 = vpop.f32.mrf.mxu0
        %412 = vmatprep.mubr.f32.mxu0 %v309
        %413 = vmatmul.mubr.f32.gmra.mxu0 %v307
        %v414 = vpop.f32.mrf.mxu0
        %v415 = vadd.f32 0.0, %v414
        %v416 = vpop.f32.mrf.mxu0
        %417 = vdwg.mxu0
        %418 = vst [vmem:[%s215] sm:$0xff] %v410
        %419 = vst [vmem:[%s215 + $0x8] sm:$0xff] %v415
        %s420 = sand.u32 %s95, 1
        %s421 = scalar_lea.sflag [#allocation4], %s420
        %s422 = sand.u32 %s95, 1
        %s423 = smul.addr %s422, 16
        %s424 = scalar_lea.vmem [#allocation8], %s423
        // Predicated region
        $region45: #{tpu_custom_call.1} parent=31 // pred_check
          %p425 = pneg %p105
        $region46: #{tpu_custom_call.1} parent=31 // pred_check_branch
          %427 = sbr.rel (%p425) target = $region48
        $region47: #{tpu_custom_call.1} parent=31 // pred_region
          %s429 = ssub.s32 256, 256
          %430 = vsyncadd %s421, %s429
          %s431 = smul.addr %s19, 128
          %s432 = scalar_lea.hbm %s3, %s431
          %s433 = sshll.u32 %s424, 4
          %s434 = int_to_ptr.vmem [resolvable:$true] %s433
          %439 = dma.vmem_to_hbm [thread:$0]  %s434, 256, %s432, %s421, 128, 256, 8
        $region48: #{tpu_custom_call.1} parent=31 // pred_fallthru
          _
      $region32: #{tpu_custom_call.1} parent=5 // pred_fallthru
        _
      %p440 = scmp.le.s32.totalorder 2, %s14
      // Predicated region
      $region49: #{tpu_custom_call.1} parent=5 // pred_check
        %p441 = pneg %p440
      $region50: #{tpu_custom_call.1} parent=5 // pred_check_branch
        %443 = sbr.rel (%p441) target = $region52
      $region51: #{tpu_custom_call.1} parent=5 // pred_region
        %s444 = ssub.s32 %s14, 2
        // Predicated region
        $region53: #{tpu_custom_call.1} parent=51 // pred_check
          %p445 = pneg %p111
        $region54: #{tpu_custom_call.1} parent=51 // pred_check_branch
          %447 = sbr.rel (%p445) target = $region56
        $region55: #{tpu_custom_call.1} parent=51 // pred_region
          %s448 = sand.u32 %s96, 1
          %s449 = scalar_lea.sflag [#allocation4], %s448
          %s450 = sand.u32 %s96, 1
          %s451 = smul.addr %s450, 16
          %s452 = scalar_lea.vmem [#allocation8], %s451
          %453 = dma.done %s449, 256
        $region56: #{tpu_custom_call.1} parent=51 // pred_fallthru
          _
      $region52: #{tpu_custom_call.1} parent=5 // pred_fallthru
        _
    $region6: #{tpu_custom_call.1} parent=1 // loop_footer
      %s18 = sadd.s32 1, %s14
    $region7: #{tpu_custom_call.1} parent=1 // loop_footer_branch
      %13 = sbr.rel target = $region3
    $region8: #{tpu_custom_call.1} parent=1 // loop_exit
      _
    %454 = vsyncpa [#allocation3], 1
    %s455 = scalar_lea.sflag [#allocation3], 1
    %456 = vsyncpa %s455, 1
    %457 = vsyncpa [#allocation6], 1
    %458 = vsyncpa [#allocation4], 1
    %s459 = scalar_lea.sflag [#allocation4], 1
    %460 = vsyncpa %s459, 1

</llo_original>
